<compile_context>
chip_gen: v6e
topology: v6e:2x2x1
jax: 0.10.0
libtpu: 0.0.40
codegen_flags: <defaults>
</compile_context>

<pallas_src>
import functools

import jax
import jax.numpy as jnp
from jax.experimental import pallas as pl
from jax.experimental.pallas import tpu as pltpu

LANE = 128    # TPU lane width
SUBLANE = 8   # TPU sublane width


def _round_up(n, m):
    return ((n + m - 1) // m) * m


def _buffered_supported():
    """True if this jax build accepts pipeline_mode=pl.Buffered(1) on BlockSpec."""
    try:
        pl.BlockSpec((8, 128), lambda i: (0, 0), pipeline_mode=pl.Buffered(1))
        return True
    except Exception:
        return False


_HAS_BUFFERED = _buffered_supported()


def mlp_kernel(x_ref, w1_ref, b1_ref, w2_ref, b2_ref, w3_ref, b3_ref, o_ref):
    # Hoist bias loads (single load per grid step); biases are f32.
    b1 = b1_ref[...]
    b2 = b2_ref[...]
    b3 = b3_ref[...]

    # fc1 + ReLU  (dropout = identity in eval mode). bf16 MXU operands, f32 accumulate.
    h1 = jnp.dot(x_ref[...], w1_ref[...], preferred_element_type=jnp.float32)
    h1 = jnp.maximum(h1 + b1, 0.0)

    # fc2 + ReLU  (dropout = identity in eval mode)
    h2 = jnp.dot(h1.astype(jnp.bfloat16), w2_ref[...],
                 preferred_element_type=jnp.float32)
    h2 = jnp.maximum(h2 + b2, 0.0)

    # fc3 (padded class columns: zero bf16 weight cols + -1e30 f32 bias -> exp == 0)
    logits = jnp.dot(h2.astype(jnp.bfloat16), w3_ref[...],
                     preferred_element_type=jnp.float32) + b3

    # Numerically stable softmax over the class axis; exact divide so rows sum to 1.
    m = jnp.max(logits, axis=-1, keepdims=True)
    e = jnp.exp(logits - m)
    denom = jnp.sum(e, axis=-1, keepdims=True)
    o_ref[...] = (e / denom).astype(o_ref.dtype)


def prepare_params(w1, b1, w2, b2, w3, b3):
    """One-time padding/casting of params (NOT in the per-forward hot path).

    Weights -> bf16, lane-aligned zero pad. Biases -> f32; fc3 pad columns get -1e30
    so padded logits contribute exactly 0 to the softmax.
    """
    F, H1 = w1.shape
    H2 = w2.shape[1]
    C = w3.shape[1]
    Fp, H1p, H2p, Cp = (_round_up(d, LANE) for d in (F, H1, H2, C))

    neg = jnp.float32(-1e30)
    w1p = jnp.zeros((Fp, H1p), jnp.bfloat16).at[:F, :H1].set(w1.astype(jnp.bfloat16))
    w2p = jnp.zeros((H1p, H2p), jnp.bfloat16).at[:H1, :H2].set(w2.astype(jnp.bfloat16))
    w3p = jnp.zeros((H2p, Cp), jnp.bfloat16).at[:H2, :C].set(w3.astype(jnp.bfloat16))
    b1p = jnp.zeros((1, H1p), jnp.float32).at[:, :H1].set(b1.reshape(1, -1).astype(jnp.float32))
    b2p = jnp.zeros((1, H2p), jnp.float32).at[:, :H2].set(b2.reshape(1, -1).astype(jnp.float32))
    b3p = jnp.full((1, Cp), neg, jnp.float32).at[:, :C].set(b3.reshape(1, -1).astype(jnp.float32))
    return (w1p, b1p, w2p, b2p, w3p, b3p)


@functools.partial(jax.jit, static_argnames=("num_classes", "block_batch"))
def neural_net_forward(x, padded_params, *, num_classes, block_batch=512):
    """x: (B, F) float; padded_params from prepare_params(). Returns (B, num_classes) f32."""
    w1p, b1p, w2p, b2p, w3p, b3p = padded_params
    B, F = x.shape
    Fp, H1p = w1p.shape
    H2p = w2p.shape[1]
    Cp = w3p.shape[1]

    # Batch tile: multiple of 8, capped at block_batch (default sized for v7x 64 MiB VMEM;
    # raise toward 1024 on v6e, keep 128-256 on v5e).
    TB = min(block_batch, _round_up(B, SUBLANE))
    Bp = _round_up(B, TB)

    # Pad x only when needed (skip the extra HBM pass when already tile-aligned). bf16 operand.
    if B == Bp and F == Fp:
        xp = x.astype(jnp.bfloat16)
    else:
        xp = jnp.zeros((Bp, Fp), jnp.bfloat16).at[:B, :F].set(x.astype(jnp.bfloat16))

    grid = (Bp // TB,)

    # Explicit scoped-VMEM budget: double-buffered x/out tiles + single-buffered bf16 weights
    # + f32 intermediates, with headroom; clamped to [32 MiB, 64 MiB] (valid on all gens).
    x_tile = TB * Fp * 2
    out_tile = TB * Cp * 4
    weight_bytes = (Fp * H1p + H1p * H2p + H2p * Cp) * 2 + (H1p + H2p + Cp) * 4
    interm_bytes = TB * (H1p + H2p + 2 * Cp) * 4
    needed = 2 * (x_tile + out_tile) + weight_bytes + interm_bytes
    vmem_limit = min(max(int(1.5 * needed) + (4 << 20), 32 << 20), 64 << 20)

    def resident_spec(shape):
        # Whole array, same block every grid step -> stays VMEM-resident; single buffer.
        nd = len(shape)
        if _HAS_BUFFERED:
            return pl.BlockSpec(shape, lambda *i: (0,) * nd, pipeline_mode=pl.Buffered(1))
        return pl.BlockSpec(shape, lambda *i: (0,) * nd)

    out_padded = pl.pallas_call(
        mlp_kernel,
        out_shape=jax.ShapeDtypeStruct((Bp, Cp), jnp.float32),
        grid=grid,
        in_specs=[
            pl.BlockSpec((TB, Fp), lambda i: (i, 0)),     # x: tiled over batch (bf16)
            resident_spec((Fp, H1p)),                     # w1 (bf16)
            resident_spec((1, H1p)),                      # b1 (f32)
            resident_spec((H1p, H2p)),                    # w2 (bf16)
            resident_spec((1, H2p)),                      # b2 (f32)
            resident_spec((H2p, Cp)),                     # w3 (bf16)
            resident_spec((1, Cp)),                       # b3 (f32, -1e30 on pad cols)
        ],
        out_specs=pl.BlockSpec((TB, Cp), lambda i: (i, 0)),  # lane-dense output
        compiler_params=pltpu.CompilerParams(
            dimension_semantics=("parallel",),            # megacore sharding where available
            vmem_limit_bytes=vmem_limit,
        ),
    )(xp, w1p, b1p, w2p, b2p, w3p, b3p)

    if Bp == B and Cp == num_classes:
        return out_padded
    return out_padded[:B, :num_classes]


def init_params(key, input_size, hidden_size, num_classes):
    # Deterministic init mimicking nn.Linear's uniform(-1/sqrt(fan_in), 1/sqrt(fan_in)).
    keys = jax.random.split(key, 6)

    def linear(kw, kb, fan_in, fan_out):
        bound = 1.0 / jnp.sqrt(fan_in)
        w = jax.random.uniform(kw, (fan_in, fan_out), jnp.float32, -bound, bound)
        b = jax.random.uniform(kb, (fan_out,), jnp.float32, -bound, bound)
        return w, b

    w1, b1 = linear(keys[0], keys[1], input_size, hidden_size)
    w2, b2 = linear(keys[2], keys[3], hidden_size, hidden_size)
    w3, b3 = linear(keys[4], keys[5], hidden_size, num_classes)
    return w1, b1, w2, b2, w3, b3


if __name__ == "__main__":
    input_size, hidden_size, num_classes = 32, 64, 10
    batch = 13  # deliberately not a multiple of 8 to exercise batch padding

    key = jax.random.PRNGKey(0)
    k_x, k_p = jax.random.split(key)
    x = jax.random.normal(k_x, (batch, input_size), jnp.float32)
    w1, b1, w2, b2, w3, b3 = init_params(k_p, input_size, hidden_size, num_classes)

    # One-time param padding/casting (outside the per-forward hot path).
    padded_params = prepare_params(w1, b1, w2, b2, w3, b3)

    # block_batch=8 so the grid has >1 step even at this small test batch.
    out = neural_net_forward(x, padded_params, num_classes=num_classes, block_batch=8)
    out = jax.block_until_ready(out)

    # sanity: shape and softmax rows sum to 1 (exact divide in kernel).
    assert out.shape == (batch, num_classes)
    assert jnp.allclose(jnp.sum(out, axis=1), 1.0, atol=1e-4)

    # cross-check against a plain JAX reference using the same bf16 MXU operands
    # (eval-mode dropout = identity).
    xb = x.astype(jnp.bfloat16)
    w1b, w2b, w3b = (w.astype(jnp.bfloat16) for w in (w1, w2, w3))
    h = jnp.maximum(jnp.dot(xb, w1b, preferred_element_type=jnp.float32) + b1[None, :], 0.0)
    h = jnp.maximum(jnp.dot(h.astype(jnp.bfloat16), w2b,
                            preferred_element_type=jnp.float32) + b2[None, :], 0.0)
    logits = jnp.dot(h.astype(jnp.bfloat16), w3b,
                     preferred_element_type=jnp.float32) + b3[None, :]
    ref = jax.nn.softmax(logits, axis=1)
    assert jnp.allclose(out, ref, atol=2e-3, rtol=2e-3)

    print("KERNEL_OK")
</pallas_src>

<mosaic_0001>
module attributes {stable_mosaic.version = 11 : i64} {
  func.func @mlp_kernel(%arg0: i32, %arg1: memref<8x128xbf16, #tpu.memory_space<vmem>>, %arg2: memref<128x128xbf16, #tpu.memory_space<vmem>>, %arg3: memref<1x128xf32, #tpu.memory_space<vmem>>, %arg4: memref<128x128xbf16, #tpu.memory_space<vmem>>, %arg5: memref<1x128xf32, #tpu.memory_space<vmem>>, %arg6: memref<128x128xbf16, #tpu.memory_space<vmem>>, %arg7: memref<1x128xf32, #tpu.memory_space<vmem>>, %arg8: memref<8x128xf32, #tpu.memory_space<vmem>>) attributes {dimension_semantics = [#tpu.dimension_semantics<parallel>], iteration_bounds = array<i64: 2>, scalar_prefetch = 0 : i64, scratch_operands = 0 : i64, tpu.core_type = #tpu.core_type<tc>, window_params = [{transform_indices = @transform_0, window_bounds = array<i64: 8, 128>}, {pipeline_mode = #tpu.pipeline_mode<synchronous>, transform_indices = @transform_1, window_bounds = array<i64: 128, 128>}, {pipeline_mode = #tpu.pipeline_mode<synchronous>, transform_indices = @transform_2, window_bounds = array<i64: 1, 128>}, {pipeline_mode = #tpu.pipeline_mode<synchronous>, transform_indices = @transform_3, window_bounds = array<i64: 128, 128>}, {pipeline_mode = #tpu.pipeline_mode<synchronous>, transform_indices = @transform_4, window_bounds = array<i64: 1, 128>}, {pipeline_mode = #tpu.pipeline_mode<synchronous>, transform_indices = @transform_5, window_bounds = array<i64: 128, 128>}, {pipeline_mode = #tpu.pipeline_mode<synchronous>, transform_indices = @transform_6, window_bounds = array<i64: 1, 128>}, {transform_indices = @transform_7, window_bounds = array<i64: 8, 128>}]} {
    %c0 = arith.constant 0 : index
    %c0_0 = arith.constant 0 : index
    %0 = vector.load %arg3[%c0, %c0_0] : memref<1x128xf32, #tpu.memory_space<vmem>>, vector<1x128xf32>
    %c0_1 = arith.constant 0 : index
    %c0_2 = arith.constant 0 : index
    %1 = vector.load %arg5[%c0_1, %c0_2] : memref<1x128xf32, #tpu.memory_space<vmem>>, vector<1x128xf32>
    %c0_3 = arith.constant 0 : index
    %c0_4 = arith.constant 0 : index
    %2 = vector.load %arg7[%c0_3, %c0_4] : memref<1x128xf32, #tpu.memory_space<vmem>>, vector<1x128xf32>
    %c0_5 = arith.constant 0 : index
    %c0_6 = arith.constant 0 : index
    %3 = vector.load %arg1[%c0_5, %c0_6] : memref<8x128xbf16, #tpu.memory_space<vmem>>, vector<8x128xbf16>
    %c0_7 = arith.constant 0 : index
    %c0_8 = arith.constant 0 : index
    %4 = vector.load %arg2[%c0_7, %c0_8] : memref<128x128xbf16, #tpu.memory_space<vmem>>, vector<128x128xbf16>
    %cst = arith.constant dense<0.000000e+00> : vector<8x128xf32>
    %5 = tpu.matmul %3, %4, %cst {dimension_numbers = #tpu.dot_dimension_numbers<[1], [0], [0], [1], [0, 0, 1, 1], [], []>} : vector<8x128xbf16>, vector<128x128xbf16>, vector<8x128xf32> -> vector<8x128xf32>
    %6 = vector.broadcast %0 : vector<1x128xf32> to vector<8x128xf32>
    %7 = arith.addf %5, %6 : vector<8x128xf32>
    %cst_9 = arith.constant 0.000000e+00 : f32
    %8 = vector.broadcast %cst_9 : f32 to vector<8x128xf32>
    %9 = arith.maximumf %7, %8 : vector<8x128xf32>
    %10 = arith.truncf %9 : vector<8x128xf32> to vector<8x128xbf16>
    %c0_10 = arith.constant 0 : index
    %c0_11 = arith.constant 0 : index
    %11 = vector.load %arg4[%c0_10, %c0_11] : memref<128x128xbf16, #tpu.memory_space<vmem>>, vector<128x128xbf16>
    %cst_12 = arith.constant dense<0.000000e+00> : vector<8x128xf32>
    %12 = tpu.matmul %10, %11, %cst_12 {dimension_numbers = #tpu.dot_dimension_numbers<[1], [0], [0], [1], [0, 0, 1, 1], [], []>} : vector<8x128xbf16>, vector<128x128xbf16>, vector<8x128xf32> -> vector<8x128xf32>
    %13 = vector.broadcast %1 : vector<1x128xf32> to vector<8x128xf32>
    %14 = arith.addf %12, %13 : vector<8x128xf32>
    %cst_13 = arith.constant 0.000000e+00 : f32
    %15 = vector.broadcast %cst_13 : f32 to vector<8x128xf32>
    %16 = arith.maximumf %14, %15 : vector<8x128xf32>
    %17 = arith.truncf %16 : vector<8x128xf32> to vector<8x128xbf16>
    %c0_14 = arith.constant 0 : index
    %c0_15 = arith.constant 0 : index
    %18 = vector.load %arg6[%c0_14, %c0_15] : memref<128x128xbf16, #tpu.memory_space<vmem>>, vector<128x128xbf16>
    %cst_16 = arith.constant dense<0.000000e+00> : vector<8x128xf32>
    %19 = tpu.matmul %17, %18, %cst_16 {dimension_numbers = #tpu.dot_dimension_numbers<[1], [0], [0], [1], [0, 0, 1, 1], [], []>} : vector<8x128xbf16>, vector<128x128xbf16>, vector<8x128xf32> -> vector<8x128xf32>
    %20 = vector.broadcast %2 : vector<1x128xf32> to vector<8x128xf32>
    %21 = arith.addf %19, %20 : vector<8x128xf32>
    %cst_17 = arith.constant dense<0xFF800000> : vector<8xf32>
    %22 = vector.multi_reduction <maximumf>, %21, %cst_17 [1] : vector<8x128xf32> to vector<8xf32>
    %23 = vector.shape_cast %22 : vector<8xf32> to vector<8x1xf32>
    %24 = vector.broadcast %23 : vector<8x1xf32> to vector<8x128xf32>
    %25 = arith.subf %21, %24 : vector<8x128xf32>
    %26 = math.exp %25 : vector<8x128xf32>
    %cst_18 = arith.constant dense<0.000000e+00> : vector<8xf32>
    %27 = vector.multi_reduction <add>, %26, %cst_18 [1] : vector<8x128xf32> to vector<8xf32>
    %28 = vector.shape_cast %27 : vector<8xf32> to vector<8x1xf32>
    %29 = vector.broadcast %28 : vector<8x1xf32> to vector<8x128xf32>
    %30 = arith.divf %26, %29 : vector<8x128xf32>
    %c0_19 = arith.constant 0 : index
    %c0_20 = arith.constant 0 : index
    %31 = vector.load %arg8[%c0_19, %c0_20] : memref<8x128xf32, #tpu.memory_space<vmem>>, vector<8x128xf32>
    tpu.vector_store %arg8[%c0_19, %c0_20], %30 {strides = array<i32>} : memref<8x128xf32, #tpu.memory_space<vmem>>, vector<8x128xf32>,
    return
  }
  func.func @transform_0(%arg0: i32) -> (i32, i32) {
    %c0_i32 = arith.constant 0 : i32
    %c0_i32_0 = arith.constant 0 : i32
    return %arg0, %c0_i32 : i32, i32
  }
  func.func @transform_1(%arg0: i32) -> (i32, i32) {
    %c0_i32 = arith.constant 0 : i32
    %c0_i32_0 = arith.constant 0 : i32
    %c0_i32_1 = arith.constant 0 : i32
    return %c0_i32, %c0_i32_0 : i32, i32
  }
  func.func @transform_2(%arg0: i32) -> (i32, i32) {
    %c0_i32 = arith.constant 0 : i32
    %c0_i32_0 = arith.constant 0 : i32
    %c0_i32_1 = arith.constant 0 : i32
    return %c0_i32, %c0_i32_0 : i32, i32
  }
  func.func @transform_3(%arg0: i32) -> (i32, i32) {
    %c0_i32 = arith.constant 0 : i32
    %c0_i32_0 = arith.constant 0 : i32
    %c0_i32_1 = arith.constant 0 : i32
    return %c0_i32, %c0_i32_0 : i32, i32
  }
  func.func @transform_4(%arg0: i32) -> (i32, i32) {
    %c0_i32 = arith.constant 0 : i32
    %c0_i32_0 = arith.constant 0 : i32
    %c0_i32_1 = arith.constant 0 : i32
    return %c0_i32, %c0_i32_0 : i32, i32
  }
  func.func @transform_5(%arg0: i32) -> (i32, i32) {
    %c0_i32 = arith.constant 0 : i32
    %c0_i32_0 = arith.constant 0 : i32
    %c0_i32_1 = arith.constant 0 : i32
    return %c0_i32, %c0_i32_0 : i32, i32
  }
  func.func @transform_6(%arg0: i32) -> (i32, i32) {
    %c0_i32 = arith.constant 0 : i32
    %c0_i32_0 = arith.constant 0 : i32
    %c0_i32_1 = arith.constant 0 : i32
    return %c0_i32, %c0_i32_0 : i32, i32
  }
  func.func @transform_7(%arg0: i32) -> (i32, i32) {
    %c0_i32 = arith.constant 0 : i32
    %c0_i32_0 = arith.constant 0 : i32
    return %arg0, %c0_i32 : i32, i32
  }
}

</mosaic_0001>

<llo_original>
// kernel: neural_net_forward.1
$region0: #{neural_net_forward.1}
  #allocation0 [shape = 'u32[]', space=smem, size = 0x4, offset = 0x4, fixed_abs, tag = 'smem constant byte address 0x4 - core index']
  #allocation1 [shape = 'u32[144,128]{1,0:T(1,128)}', space=vmem, size = 0x12000, scoped, tag = 'internal scratch']
  %s0 = inlined_call_operand.vmem [shape: bf16[16,128], index: 0, kind: input, shape index: {}]
  %s1 = inlined_call_operand.hbm [shape: bf16[128,128], index: 1, kind: input, shape index: {}]
  %s2 = inlined_call_operand.vmem [shape: f32[1,128], index: 2, kind: input, shape index: {}]
  %s3 = inlined_call_operand.hbm [shape: bf16[128,128], index: 3, kind: input, shape index: {}]
  %s4 = inlined_call_operand.vmem [shape: f32[1,128], index: 4, kind: input, shape index: {}]
  %s5 = inlined_call_operand.hbm [shape: bf16[128,128], index: 5, kind: input, shape index: {}]
  %s6 = inlined_call_operand.vmem [shape: f32[1,128], index: 6, kind: input, shape index: {}]
  %s7 = inlined_call_operand.hbm [shape: f32[16,128], index: 7, kind: output, shape index: {}]
  %s8 = sld [smem:[#allocation0]]
  $region73: #{neural_net_forward.1} parent=0
    _
  %s10 = ssub.s32 1, %s8
  %s11 = scalar_select 0, %s10, %s8
  $region1: #{neural_net_forward.1} parent=0
    #allocation2 [shape = 'u8[32768]{0}', space=vmem, size = 0x8000, scoped, tag = 'input window, operand 1, single buffered']
    #allocation3 [shape = 's32[2]{0}', space=sflag, size = 0x8, scoped, tag = 'scoped memory for neural_net_forward.1']
    #allocation4 [shape = 's32[2]{0}', space=sflag, size = 0x8, scoped, tag = 'scoped memory for neural_net_forward.1']
    #allocation5 [shape = 'u8[32768]{0}', space=vmem, size = 0x8000, scoped, tag = 'input window, operand 3, single buffered']
    #allocation6 [shape = 's32[1]{0}', space=sflag, size = 0x4, scoped, tag = 'scoped memory for neural_net_forward.1']
    #allocation7 [shape = 'u8[32768]{0}', space=vmem, size = 0x8000, scoped, tag = 'input window, operand 5, single buffered']
    #allocation8 [shape = 'u8[8192]{0}', space=vmem, size = 0x2000, scoped, tag = 'output window, operand 0']
    %12 = vsyncpa [#allocation3], 0
    %13 = vsyncpa [#allocation6], 0
    %14 = vsyncpa [#allocation4], 0
    %s15 = scalar_lea.sflag [#allocation4], 1
    %16 = vsyncpa %s15, 0
    loop: start=0, step=1, limit=4
    $region2: #{neural_net_forward.1} parent=1 // loop_pre_header
      _
    $region3: #{neural_net_forward.1} parent=1 // loop_header
      %s18 = sphi 0, %s22
      %p19 = scmp.ge.s32.totalorder %s18, 4
      %s28 = sphi 0, %s30
      %s31 = sphi 0, %s28
      %s32 = sphi 0, %s31
      %s48 = sphi 0, %s32
      %s52 = sphi 0, %s52
      %s54 = sphi 0, %s52
      %s55 = sphi 0, %s54
      %s69 = sphi 0, %s55
      %s73 = sphi 0, %s73
      %s75 = sphi 0, %s73
      %s76 = sphi 0, %s75
      %s90 = sphi 0, %s76
      %s94 = sphi 0, %s94
      %s96 = sphi 0, %s94
      %s97 = sphi 0, %s96
      %s111 = sphi 0, %s97
      %s115 = sphi 0, %s115
      %s117 = sphi 0, %s115
      %s118 = sphi 0, %s117
      %s132 = sphi 0, %s118
      %s136 = sphi 0, %s136
      %s138 = sphi 0, %s136
      %s139 = sphi 0, %s138
      %s153 = sphi 0, %s139
      %s157 = sphi 0, %s157
      %s159 = sphi 0, %s157
      %s160 = sphi 0, %s159
      %s174 = sphi 0, %s160
      %s180 = sphi 0, %s182
      %s183 = sphi 0, %s180
      %s184 = sphi 0, %s183
      %s200 = sphi 0, %s184
    $region4: #{neural_net_forward.1} parent=1 // loop_header_branch
      %21 = sbr.rel (%p19) target = $region8
    $region5: #{neural_net_forward.1} parent=1 // loop_body
      %s23 = ssub.s32 %s18, 1
      %s24 = ssub.s32 %s18, 2
      %s25 = sadd.s32 %s18, 1
      %s26 = ssub.s32 %s18, %s25
      %p27 = scmp.eq.s32.totalorder %s26, 0
      %s29 = sadd.s32 %s28, 1
      %s30 = scalar_select %p27, %s28, %s29
      %p33 = pneg %p27
      %p34 = scmp.eq.s32.totalorder %s18, 1
      %p35 = por %p33, %p34
      %p36 = scmp.ne.s32.totalorder %s28, %s31
      %p37 = scmp.eq.s32.totalorder %s18, 0
      %p38 = por %p36, %p37
      %p39 = scmp.ne.s32.totalorder %s28, %s31
      %p40 = scmp.eq.s32.totalorder %s23, 1
      %p41 = por %p39, %p40
      %p42 = scmp.ne.s32.totalorder %s31, %s32
      %p43 = scmp.eq.s32.totalorder %s23, 0
      %p44 = por %p42, %p43
      %p45 = scmp.ne.s32.totalorder %s31, %s32
      %p46 = scmp.eq.s32.totalorder %s24, 1
      %p47 = por %p45, %p46
      %p49 = scmp.ne.s32.totalorder %s32, %s48
      %p50 = scmp.eq.s32.totalorder %s24, 0
      %p51 = por %p49, %p50
      %s53 = sadd.s32 %s52, 1
      %p56 = scmp.eq.s32.totalorder %s18, 1
      %p57 = scmp.ne.s32.totalorder %s52, %s54
      %p58 = scmp.eq.s32.totalorder %s18, 0
      %p59 = por %p57, %p58
      %p60 = scmp.ne.s32.totalorder %s52, %s54
      %p61 = scmp.eq.s32.totalorder %s23, 1
      %p62 = por %p60, %p61
      %p63 = scmp.ne.s32.totalorder %s54, %s55
      %p64 = scmp.eq.s32.totalorder %s23, 0
      %p65 = por %p63, %p64
      %p66 = scmp.ne.s32.totalorder %s54, %s55
      %p67 = scmp.eq.s32.totalorder %s24, 1
      %p68 = por %p66, %p67
      %p70 = scmp.ne.s32.totalorder %s55, %s69
      %p71 = scmp.eq.s32.totalorder %s24, 0
      %p72 = por %p70, %p71
      %s74 = sadd.s32 %s73, 1
      %p77 = scmp.eq.s32.totalorder %s18, 1
      %p78 = scmp.ne.s32.totalorder %s73, %s75
      %p79 = scmp.eq.s32.totalorder %s18, 0
      %p80 = por %p78, %p79
      %p81 = scmp.ne.s32.totalorder %s73, %s75
      %p82 = scmp.eq.s32.totalorder %s23, 1
      %p83 = por %p81, %p82
      %p84 = scmp.ne.s32.totalorder %s75, %s76
      %p85 = scmp.eq.s32.totalorder %s23, 0
      %p86 = por %p84, %p85
      %p87 = scmp.ne.s32.totalorder %s75, %s76
      %p88 = scmp.eq.s32.totalorder %s24, 1
      %p89 = por %p87, %p88
      %p91 = scmp.ne.s32.totalorder %s76, %s90
      %p92 = scmp.eq.s32.totalorder %s24, 0
      %p93 = por %p91, %p92
      %s95 = sadd.s32 %s94, 1
      %p98 = scmp.eq.s32.totalorder %s18, 1
      %p99 = scmp.ne.s32.totalorder %s94, %s96
      %p100 = scmp.eq.s32.totalorder %s18, 0
      %p101 = por %p99, %p100
      %p102 = scmp.ne.s32.totalorder %s94, %s96
      %p103 = scmp.eq.s32.totalorder %s23, 1
      %p104 = por %p102, %p103
      %p105 = scmp.ne.s32.totalorder %s96, %s97
      %p106 = scmp.eq.s32.totalorder %s23, 0
      %p107 = por %p105, %p106
      %p108 = scmp.ne.s32.totalorder %s96, %s97
      %p109 = scmp.eq.s32.totalorder %s24, 1
      %p110 = por %p108, %p109
      %p112 = scmp.ne.s32.totalorder %s97, %s111
      %p113 = scmp.eq.s32.totalorder %s24, 0
      %p114 = por %p112, %p113
      %s116 = sadd.s32 %s115, 1
      %p119 = scmp.eq.s32.totalorder %s18, 1
      %p120 = scmp.ne.s32.totalorder %s115, %s117
      %p121 = scmp.eq.s32.totalorder %s18, 0
      %p122 = por %p120, %p121
      %p123 = scmp.ne.s32.totalorder %s115, %s117
      %p124 = scmp.eq.s32.totalorder %s23, 1
      %p125 = por %p123, %p124
      %p126 = scmp.ne.s32.totalorder %s117, %s118
      %p127 = scmp.eq.s32.totalorder %s23, 0
      %p128 = por %p126, %p127
      %p129 = scmp.ne.s32.totalorder %s117, %s118
      %p130 = scmp.eq.s32.totalorder %s24, 1
      %p131 = por %p129, %p130
      %p133 = scmp.ne.s32.totalorder %s118, %s132
      %p134 = scmp.eq.s32.totalorder %s24, 0
      %p135 = por %p133, %p134
      %s137 = sadd.s32 %s136, 1
      %p140 = scmp.eq.s32.totalorder %s18, 1
      %p141 = scmp.ne.s32.totalorder %s136, %s138
      %p142 = scmp.eq.s32.totalorder %s18, 0
      %p143 = por %p141, %p142
      %p144 = scmp.ne.s32.totalorder %s136, %s138
      %p145 = scmp.eq.s32.totalorder %s23, 1
      %p146 = por %p144, %p145
      %p147 = scmp.ne.s32.totalorder %s138, %s139
      %p148 = scmp.eq.s32.totalorder %s23, 0
      %p149 = por %p147, %p148
      %p150 = scmp.ne.s32.totalorder %s138, %s139
      %p151 = scmp.eq.s32.totalorder %s24, 1
      %p152 = por %p150, %p151
      %p154 = scmp.ne.s32.totalorder %s139, %s153
      %p155 = scmp.eq.s32.totalorder %s24, 0
      %p156 = por %p154, %p155
      %s158 = sadd.s32 %s157, 1
      %p161 = scmp.eq.s32.totalorder %s18, 1
      %p162 = scmp.ne.s32.totalorder %s157, %s159
      %p163 = scmp.eq.s32.totalorder %s18, 0
      %p164 = por %p162, %p163
      %p165 = scmp.ne.s32.totalorder %s157, %s159
      %p166 = scmp.eq.s32.totalorder %s23, 1
      %p167 = por %p165, %p166
      %p168 = scmp.ne.s32.totalorder %s159, %s160
      %p169 = scmp.eq.s32.totalorder %s23, 0
      %p170 = por %p168, %p169
      %p171 = scmp.ne.s32.totalorder %s159, %s160
      %p172 = scmp.eq.s32.totalorder %s24, 1
      %p173 = por %p171, %p172
      %p175 = scmp.ne.s32.totalorder %s160, %s174
      %p176 = scmp.eq.s32.totalorder %s24, 0
      %p177 = por %p175, %p176
      %s178 = ssub.s32 %s18, %s25
      %p179 = scmp.eq.s32.totalorder %s178, 0
      %s181 = sadd.s32 %s180, 1
      %s182 = scalar_select %p179, %s180, %s181
      %p185 = pneg %p179
      %p186 = scmp.eq.s32.totalorder %s18, 1
      %p187 = por %p185, %p186
      %p188 = scmp.ne.s32.totalorder %s180, %s183
      %p189 = scmp.eq.s32.totalorder %s18, 0
      %p190 = por %p188, %p189
      %p191 = scmp.ne.s32.totalorder %s180, %s183
      %p192 = scmp.eq.s32.totalorder %s23, 1
      %p193 = por %p191, %p192
      %p194 = scmp.ne.s32.totalorder %s183, %s184
      %p195 = scmp.eq.s32.totalorder %s23, 0
      %p196 = por %p194, %p195
      %p197 = scmp.ne.s32.totalorder %s183, %s184
      %p198 = scmp.eq.s32.totalorder %s24, 1
      %p199 = por %p197, %p198
      %p201 = scmp.ne.s32.totalorder %s184, %s200
      %p202 = scmp.eq.s32.totalorder %s24, 0
      %p203 = por %p201, %p202
      %p204 = scmp.le.s32.totalorder 1, %s18
      %p205 = scmp.lt.s32.totalorder %s18, 3
      %p206 = pnand %p204, %p205
      %p207 = pneg %p206
      // Predicated region
      $region9: #{neural_net_forward.1} parent=5 // pred_check
        _
      $region10: #{neural_net_forward.1} parent=5 // pred_check_branch
        %209 = sbr.rel (%p206) target = $region12
      $region11: #{neural_net_forward.1} parent=5 // pred_region
        %s210 = ssub.s32 %s18, 1
        // Predicated region
        $region13: #{neural_net_forward.1} parent=11 // pred_check
          %p211 = pneg %p65
        $region14: #{neural_net_forward.1} parent=11 // pred_check_branch
          %213 = sbr.rel (%p211) target = $region16
        $region15: #{neural_net_forward.1} parent=11 // pred_region
          %s215 = ssub.s32 1024, 1024
          %216 = vsyncadd [#allocation3], %s215
          %s217 = sshll.u32 [#allocation2], 4
          %s218 = int_to_ptr.vmem [resolvable:$true] %s217
          %223 = dma.hbm_to_vmem [thread:$0]  %s1, 1024, %s218, [#allocation3], 64, 64, 4
        $region16: #{neural_net_forward.1} parent=11 // pred_fallthru
          _
        // Predicated region
        $region17: #{neural_net_forward.1} parent=11 // pred_check
          %p224 = pneg %p86
        $region18: #{neural_net_forward.1} parent=11 // pred_check_branch
          %226 = sbr.rel (%p224) target = $region20
        $region19: #{neural_net_forward.1} parent=11 // pred_region
          _
        $region20: #{neural_net_forward.1} parent=11 // pred_fallthru
          _
        // Predicated region
        $region21: #{neural_net_forward.1} parent=11 // pred_check
          %p227 = pneg %p107
        $region22: #{neural_net_forward.1} parent=11 // pred_check_branch
          %229 = sbr.rel (%p227) target = $region24
        $region23: #{neural_net_forward.1} parent=11 // pred_region
          %s231 = ssub.s32 1024, 1024
          %232 = vsyncadd [#allocation6], %s231
          %s233 = sshll.u32 [#allocation5], 4
          %s234 = int_to_ptr.vmem [resolvable:$true] %s233
          %239 = dma.hbm_to_vmem [thread:$0]  %s3, 1024, %s234, [#allocation6], 64, 64, 4
        $region24: #{neural_net_forward.1} parent=11 // pred_fallthru
          _
        // Predicated region
        $region25: #{neural_net_forward.1} parent=11 // pred_check
          %p240 = pneg %p128
        $region26: #{neural_net_forward.1} parent=11 // pred_check_branch
          %242 = sbr.rel (%p240) target = $region28
        $region27: #{neural_net_forward.1} parent=11 // pred_region
          _
        $region28: #{neural_net_forward.1} parent=11 // pred_fallthru
          _
        // Predicated region
        $region29: #{neural_net_forward.1} parent=11 // pred_check
          %p243 = pneg %p149
        $region30: #{neural_net_forward.1} parent=11 // pred_check_branch
          %245 = sbr.rel (%p243) target = $region32
        $region31: #{neural_net_forward.1} parent=11 // pred_region
          %s247 = ssub.s32 1024, 1024
          %248 = vsyncadd [#allocation6], %s247
          %s249 = sshll.u32 [#allocation7], 4
          %s250 = int_to_ptr.vmem [resolvable:$true] %s249
          %255 = dma.hbm_to_vmem [thread:$0]  %s5, 1024, %s250, [#allocation6], 64, 64, 4
        $region32: #{neural_net_forward.1} parent=11 // pred_fallthru
          _
        // Predicated region
        $region33: #{neural_net_forward.1} parent=11 // pred_check
          %p256 = pneg %p170
        $region34: #{neural_net_forward.1} parent=11 // pred_check_branch
          %258 = sbr.rel (%p256) target = $region36
        $region35: #{neural_net_forward.1} parent=11 // pred_region
          _
        $region36: #{neural_net_forward.1} parent=11 // pred_fallthru
          _
      $region12: #{neural_net_forward.1} parent=5 // pred_fallthru
        _
      %p259 = scmp.lt.s32.totalorder %s18, 2
      // Predicated region
      $region37: #{neural_net_forward.1} parent=5 // pred_check
        %p260 = pneg %p259
      $region38: #{neural_net_forward.1} parent=5 // pred_check_branch
        %262 = sbr.rel (%p260) target = $region40
      $region39: #{neural_net_forward.1} parent=5 // pred_region
        // Predicated region
        $region41: #{neural_net_forward.1} parent=39 // pred_check
          %p263 = pneg %p38
        $region42: #{neural_net_forward.1} parent=39 // pred_check_branch
          %265 = sbr.rel (%p263) target = $region44
        $region43: #{neural_net_forward.1} parent=39 // pred_region
          %p266 = scmp.lt.s32.totalorder %s18, 1
          %s267 = scalar_select %p266, %s18, 1
          %s268 = smul.addr %s267, 4
          %s269 = scalar_lea.vmem %s0, %s268
        $region44: #{neural_net_forward.1} parent=39 // pred_fallthru
          _
      $region40: #{neural_net_forward.1} parent=5 // pred_fallthru
        _
      %p270 = scmp.le.s32.totalorder 1, %s18
      %p271 = scmp.lt.s32.totalorder %s18, 3
      %p272 = pnand %p270, %p271
      %p273 = pneg %p272
      // Predicated region
      $region45: #{neural_net_forward.1} parent=5 // pred_check
        _
      $region46: #{neural_net_forward.1} parent=5 // pred_check_branch
        %275 = sbr.rel (%p272) target = $region48
      $region47: #{neural_net_forward.1} parent=5 // pred_region
        %s276 = ssub.s32 %s18, 1
        // Predicated region
        $region49: #{neural_net_forward.1} parent=47 // pred_check
          %p277 = pneg %p65
        $region50: #{neural_net_forward.1} parent=47 // pred_check_branch
          %279 = sbr.rel (%p277) target = $region52
        $region51: #{neural_net_forward.1} parent=47 // pred_region
          %280 = dma.done [#allocation3], 1024
        $region52: #{neural_net_forward.1} parent=47 // pred_fallthru
          _
        // Predicated region
        $region53: #{neural_net_forward.1} parent=47 // pred_check
          %p281 = pneg %p107
        $region54: #{neural_net_forward.1} parent=47 // pred_check_branch
          %283 = sbr.rel (%p281) target = $region56
        $region55: #{neural_net_forward.1} parent=47 // pred_region
          %284 = dma.done [#allocation6], 1024
        $region56: #{neural_net_forward.1} parent=47 // pred_fallthru
          _
        // Predicated region
        $region57: #{neural_net_forward.1} parent=47 // pred_check
          %p285 = pneg %p149
        $region58: #{neural_net_forward.1} parent=47 // pred_check_branch
          %287 = sbr.rel (%p285) target = $region60
        $region59: #{neural_net_forward.1} parent=47 // pred_region
          %288 = dma.done [#allocation6], 1024
        $region60: #{neural_net_forward.1} parent=47 // pred_fallthru
          _
        %p289 = scmp.lt.s32.totalorder %s23, 1
        %s290 = scalar_select %p289, %s23, 1
        %s291 = smul.addr %s290, 4
        %s292 = scalar_lea.vmem %s0, %s291
        %p293 = pneg %p44
        %p294 = pneg %p41
        %p295 = pneg %p65
        %p296 = pneg %p62
        %p297 = pneg %p86
        %p298 = pneg %p83
        %p299 = pneg %p107
        %p300 = pneg %p104
        %p301 = pneg %p128
        %p302 = pneg %p125
        %p303 = pneg %p149
        %p304 = pneg %p146
        %p305 = pneg %p170
        %p306 = pneg %p167
        %p307 = pneg %p196
        %p308 = pneg %p193
        %s309 = sand.u32 %s183, 1
        %s310 = scalar_lea.sflag [#allocation4], %s309
        %s311 = sand.u32 %s183, 1
        %s312 = smul.addr %s311, 8
        %s313 = scalar_lea.vmem [#allocation8], %s312
        %p314 = scmp.lt.s32.totalorder %s23, 1
        %s315 = scalar_select %p314, %s23, 1
        %s316 = smul.addr %s315, 4
        %s317 = scalar_lea.vmem %s0, %s316
        %v319 = vld [vmem:[%s2] sm:$0x1]
        %v320 = vld [vmem:[%s4] sm:$0x1]
        %v321 = vld [vmem:[%s6] sm:$0x1]
        %v322 = vld [vmem:[%s317] sm:$0xf]
        %v323 = vld [vmem:[#allocation2] sm:$0xf]
        %v324 = vld [vmem:[#allocation2 + $0x4] sm:$0xf]
        %v325 = vld [vmem:[#allocation2 + $0x8] sm:$0xf]
        %v326 = vld [vmem:[#allocation2 + $0xc] sm:$0xf]
        %v327 = vld [vmem:[#allocation2 + $0x10] sm:$0xf]
        %v328 = vld [vmem:[#allocation2 + $0x14] sm:$0xf]
        %v329 = vld [vmem:[#allocation2 + $0x18] sm:$0xf]
        %v330 = vld [vmem:[#allocation2 + $0x1c] sm:$0xf]
        %v331 = vld [vmem:[#allocation2 + $0x20] sm:$0xf]
        %v332 = vld [vmem:[#allocation2 + $0x24] sm:$0xf]
        %v333 = vld [vmem:[#allocation2 + $0x28] sm:$0xf]
        %v334 = vld [vmem:[#allocation2 + $0x2c] sm:$0xf]
        %v335 = vld [vmem:[#allocation2 + $0x30] sm:$0xf]
        %v336 = vld [vmem:[#allocation2 + $0x34] sm:$0xf]
        %v337 = vld [vmem:[#allocation2 + $0x38] sm:$0xf]
        %v338 = vld [vmem:[#allocation2 + $0x3c] sm:$0xf]
        %v340 = vlaneseq
        %v341 = vshrl.u32 %v340, 7
        %v342 = vsub.s32 0, %v341
        %v343 = vrot.slane %v319, %v342
        %v361 = vunpack.c.l.b16 %v323
        %v362 = vunpack.c.l.b16 %v324
        %v363 = vunpack.c.l.b16 %v325
        %v364 = vunpack.c.l.b16 %v326
        %v365 = vunpack.c.l.b16 %v327
        %v366 = vunpack.c.l.b16 %v328
        %v367 = vunpack.c.l.b16 %v329
        %v368 = vunpack.c.l.b16 %v330
        %v369 = vunpack.c.l.b16 %v331
        %v370 = vunpack.c.l.b16 %v332
        %v371 = vunpack.c.l.b16 %v333
        %v372 = vunpack.c.l.b16 %v334
        %v373 = vunpack.c.l.b16 %v335
        %v374 = vunpack.c.l.b16 %v336
        %v375 = vunpack.c.l.b16 %v337
        %v376 = vunpack.c.l.b16 %v338
        %v377 = vpack.c.b16 %v362, %v361
        %v378 = vpack.c.b16 %v364, %v363
        %v379 = vpack.c.b16 %v366, %v365
        %v380 = vpack.c.b16 %v368, %v367
        %v381 = vpack.c.b16 %v370, %v369
        %v382 = vpack.c.b16 %v372, %v371
        %v383 = vpack.c.b16 %v374, %v373
        %v384 = vpack.c.b16 %v376, %v375
        %393 = vmatprep.subr.bf16.mxu0 0
        %394 = vmatpush1.bf16.msra.mxu0 %v384
        %395 = vmatprep.subr.bf16.mxu0 0
        %396 = vmatpush1.bf16.msra.mxu0 %v383
        %397 = vmatprep.subr.bf16.mxu0 0
        %398 = vmatpush1.bf16.msra.mxu0 %v382
        %399 = vmatprep.subr.bf16.mxu0 0
        %400 = vmatpush1.bf16.msra.mxu0 %v381
        %401 = vmatprep.subr.bf16.mxu0 0
        %402 = vmatpush1.bf16.msra.mxu0 %v380
        %403 = vmatprep.subr.bf16.mxu0 0
        %404 = vmatpush1.bf16.msra.mxu0 %v379
        %405 = vmatprep.subr.bf16.mxu0 0
        %406 = vmatpush1.bf16.msra.mxu0 %v378
        %407 = vmatprep.subr.bf16.mxu0 0
        %408 = vmatpush1.bf16.msra.mxu0 %v377
        %409 = vmatprep.subr.bf16.mxu0 0
        %410 = vmatpush2.bf16.msra.mxu0 0
        %411 = vmatprep.subr.bf16.mxu0 0
        %412 = vmatpush2.bf16.msra.mxu0 0
        %413 = vmatprep.subr.bf16.mxu0 0
        %414 = vmatpush2.bf16.msra.mxu0 0
        %415 = vmatprep.subr.bf16.mxu0 0
        %416 = vmatpush2.bf16.msra.mxu0 0
        %417 = vmatprep.subr.bf16.mxu0 0
        %418 = vmatpush2.bf16.msra.mxu0 0
        %419 = vmatprep.subr.bf16.mxu0 0
        %420 = vmatpush2.bf16.msra.mxu0 0
        %421 = vmatprep.subr.bf16.mxu0 0
        %422 = vmatpush2.bf16.msra.mxu0 0
        %423 = vmatprep.subr.bf16.mxu0 0
        %424 = vmatpush2.bf16.msra.mxu0 0
        %425 = vmatprep.mubr.bf16.mxu0 0
        %426 = vmatmul.mubr.bf16.gmra.mxu0 %v322
        %v427 = vpop.f32.mrf.mxu0
        %v428 = vadd.f32 %v343, %v427
        %v429 = vpop.f32.mrf.mxu0
        %v430 = vpop.f32.mrf.mxu0
        %v431 = vpop.f32.mrf.mxu0
        %432 = vdwg.mxu0
        %v433 = vmax.f32 %v428, 0.0
        %v434 = vpack.c.bf16 %v433, %v433
        %v435 = vld [vmem:[#allocation5] sm:$0xf]
        %v436 = vld [vmem:[#allocation5 + $0x4] sm:$0xf]
        %v437 = vld [vmem:[#allocation5 + $0x8] sm:$0xf]
        %v438 = vld [vmem:[#allocation5 + $0xc] sm:$0xf]
        %v439 = vld [vmem:[#allocation5 + $0x10] sm:$0xf]
        %v440 = vld [vmem:[#allocation5 + $0x14] sm:$0xf]
        %v441 = vld [vmem:[#allocation5 + $0x18] sm:$0xf]
        %v442 = vld [vmem:[#allocation5 + $0x1c] sm:$0xf]
        %v443 = vld [vmem:[#allocation5 + $0x20] sm:$0xf]
        %v444 = vld [vmem:[#allocation5 + $0x24] sm:$0xf]
        %v445 = vld [vmem:[#allocation5 + $0x28] sm:$0xf]
        %v446 = vld [vmem:[#allocation5 + $0x2c] sm:$0xf]
        %v447 = vld [vmem:[#allocation5 + $0x30] sm:$0xf]
        %v448 = vld [vmem:[#allocation5 + $0x34] sm:$0xf]
        %v449 = vld [vmem:[#allocation5 + $0x38] sm:$0xf]
        %v450 = vld [vmem:[#allocation5 + $0x3c] sm:$0xf]
        %v452 = vlaneseq
        %v453 = vshrl.u32 %v452, 7
        %v454 = vsub.s32 0, %v453
        %v455 = vrot.slane %v320, %v454
        %v473 = vunpack.c.l.b16 %v435
        %v474 = vunpack.c.l.b16 %v436
        %v475 = vunpack.c.l.b16 %v437
        %v476 = vunpack.c.l.b16 %v438
        %v477 = vunpack.c.l.b16 %v439
        %v478 = vunpack.c.l.b16 %v440
        %v479 = vunpack.c.l.b16 %v441
        %v480 = vunpack.c.l.b16 %v442
        %v481 = vunpack.c.l.b16 %v443
        %v482 = vunpack.c.l.b16 %v444
        %v483 = vunpack.c.l.b16 %v445
        %v484 = vunpack.c.l.b16 %v446
        %v485 = vunpack.c.l.b16 %v447
        %v486 = vunpack.c.l.b16 %v448
        %v487 = vunpack.c.l.b16 %v449
        %v488 = vunpack.c.l.b16 %v450
        %v489 = vpack.c.b16 %v474, %v473
        %v490 = vpack.c.b16 %v476, %v475
        %v491 = vpack.c.b16 %v478, %v477
        %v492 = vpack.c.b16 %v480, %v479
        %v493 = vpack.c.b16 %v482, %v481
        %v494 = vpack.c.b16 %v484, %v483
        %v495 = vpack.c.b16 %v486, %v485
        %v496 = vpack.c.b16 %v488, %v487
        %505 = vmatprep.subr.bf16.mxu0 0
        %506 = vmatpush1.bf16.msra.mxu0 %v496
        %507 = vmatprep.subr.bf16.mxu0 0
        %508 = vmatpush1.bf16.msra.mxu0 %v495
        %509 = vmatprep.subr.bf16.mxu0 0
        %510 = vmatpush1.bf16.msra.mxu0 %v494
        %511 = vmatprep.subr.bf16.mxu0 0
        %512 = vmatpush1.bf16.msra.mxu0 %v493
        %513 = vmatprep.subr.bf16.mxu0 0
        %514 = vmatpush1.bf16.msra.mxu0 %v492
        %515 = vmatprep.subr.bf16.mxu0 0
        %516 = vmatpush1.bf16.msra.mxu0 %v491
        %517 = vmatprep.subr.bf16.mxu0 0
        %518 = vmatpush1.bf16.msra.mxu0 %v490
        %519 = vmatprep.subr.bf16.mxu0 0
        %520 = vmatpush1.bf16.msra.mxu0 %v489
        %521 = vmatprep.subr.bf16.mxu0 0
        %522 = vmatpush2.bf16.msra.mxu0 0
        %523 = vmatprep.subr.bf16.mxu0 0
        %524 = vmatpush2.bf16.msra.mxu0 0
        %525 = vmatprep.subr.bf16.mxu0 0
        %526 = vmatpush2.bf16.msra.mxu0 0
        %527 = vmatprep.subr.bf16.mxu0 0
        %528 = vmatpush2.bf16.msra.mxu0 0
        %529 = vmatprep.subr.bf16.mxu0 0
        %530 = vmatpush2.bf16.msra.mxu0 0
        %531 = vmatprep.subr.bf16.mxu0 0
        %532 = vmatpush2.bf16.msra.mxu0 0
        %533 = vmatprep.subr.bf16.mxu0 0
        %534 = vmatpush2.bf16.msra.mxu0 0
        %535 = vmatprep.subr.bf16.mxu0 0
        %536 = vmatpush2.bf16.msra.mxu0 0
        %537 = vmatprep.mubr.bf16.mxu0 0
        %538 = vmatmul.mubr.bf16.gmra.mxu0 %v434
        %v539 = vpop.f32.mrf.mxu0
        %v540 = vadd.f32 %v455, %v539
        %v541 = vpop.f32.mrf.mxu0
        %v542 = vpop.f32.mrf.mxu0
        %v543 = vpop.f32.mrf.mxu0
        %544 = vdwg.mxu0
        %v545 = vmax.f32 %v540, 0.0
        %v546 = vpack.c.bf16 %v545, %v545
        %v547 = vld [vmem:[#allocation7] sm:$0xf]
        %v548 = vld [vmem:[#allocation7 + $0x4] sm:$0xf]
        %v549 = vld [vmem:[#allocation7 + $0x8] sm:$0xf]
        %v550 = vld [vmem:[#allocation7 + $0xc] sm:$0xf]
        %v551 = vld [vmem:[#allocation7 + $0x10] sm:$0xf]
        %v552 = vld [vmem:[#allocation7 + $0x14] sm:$0xf]
        %v553 = vld [vmem:[#allocation7 + $0x18] sm:$0xf]
        %v554 = vld [vmem:[#allocation7 + $0x1c] sm:$0xf]
        %v555 = vld [vmem:[#allocation7 + $0x20] sm:$0xf]
        %v556 = vld [vmem:[#allocation7 + $0x24] sm:$0xf]
        %v557 = vld [vmem:[#allocation7 + $0x28] sm:$0xf]
        %v558 = vld [vmem:[#allocation7 + $0x2c] sm:$0xf]
        %v559 = vld [vmem:[#allocation7 + $0x30] sm:$0xf]
        %v560 = vld [vmem:[#allocation7 + $0x34] sm:$0xf]
        %v561 = vld [vmem:[#allocation7 + $0x38] sm:$0xf]
        %v562 = vld [vmem:[#allocation7 + $0x3c] sm:$0xf]
        %v564 = vlaneseq
        %v565 = vshrl.u32 %v564, 7
        %v566 = vsub.s32 0, %v565
        %v567 = vrot.slane %v321, %v566
        %v585 = vunpack.c.l.b16 %v547
        %v586 = vunpack.c.l.b16 %v548
        %v587 = vunpack.c.l.b16 %v549
        %v588 = vunpack.c.l.b16 %v550
        %v589 = vunpack.c.l.b16 %v551
        %v590 = vunpack.c.l.b16 %v552
        %v591 = vunpack.c.l.b16 %v553
        %v592 = vunpack.c.l.b16 %v554
        %v593 = vunpack.c.l.b16 %v555
        %v594 = vunpack.c.l.b16 %v556
        %v595 = vunpack.c.l.b16 %v557
        %v596 = vunpack.c.l.b16 %v558
        %v597 = vunpack.c.l.b16 %v559
        %v598 = vunpack.c.l.b16 %v560
        %v599 = vunpack.c.l.b16 %v561
        %v600 = vunpack.c.l.b16 %v562
        %v601 = vpack.c.b16 %v586, %v585
        %v602 = vpack.c.b16 %v588, %v587
        %v603 = vpack.c.b16 %v590, %v589
        %v604 = vpack.c.b16 %v592, %v591
        %v605 = vpack.c.b16 %v594, %v593
        %v606 = vpack.c.b16 %v596, %v595
        %v607 = vpack.c.b16 %v598, %v597
        %v608 = vpack.c.b16 %v600, %v599
        %617 = vmatprep.subr.bf16.mxu0 0
        %618 = vmatpush1.bf16.msra.mxu0 %v608
        %619 = vmatprep.subr.bf16.mxu0 0
        %620 = vmatpush1.bf16.msra.mxu0 %v607
        %621 = vmatprep.subr.bf16.mxu0 0
        %622 = vmatpush1.bf16.msra.mxu0 %v606
        %623 = vmatprep.subr.bf16.mxu0 0
        %624 = vmatpush1.bf16.msra.mxu0 %v605
        %625 = vmatprep.subr.bf16.mxu0 0
        %626 = vmatpush1.bf16.msra.mxu0 %v604
        %627 = vmatprep.subr.bf16.mxu0 0
        %628 = vmatpush1.bf16.msra.mxu0 %v603
        %629 = vmatprep.subr.bf16.mxu0 0
        %630 = vmatpush1.bf16.msra.mxu0 %v602
        %631 = vmatprep.subr.bf16.mxu0 0
        %632 = vmatpush1.bf16.msra.mxu0 %v601
        %633 = vmatprep.subr.bf16.mxu0 0
        %634 = vmatpush2.bf16.msra.mxu0 0
        %635 = vmatprep.subr.bf16.mxu0 0
        %636 = vmatpush2.bf16.msra.mxu0 0
        %637 = vmatprep.subr.bf16.mxu0 0
        %638 = vmatpush2.bf16.msra.mxu0 0
        %639 = vmatprep.subr.bf16.mxu0 0
        %640 = vmatpush2.bf16.msra.mxu0 0
        %641 = vmatprep.subr.bf16.mxu0 0
        %642 = vmatpush2.bf16.msra.mxu0 0
        %643 = vmatprep.subr.bf16.mxu0 0
        %644 = vmatpush2.bf16.msra.mxu0 0
        %645 = vmatprep.subr.bf16.mxu0 0
        %646 = vmatpush2.bf16.msra.mxu0 0
        %647 = vmatprep.subr.bf16.mxu0 0
        %648 = vmatpush2.bf16.msra.mxu0 0
        %649 = vmatprep.mubr.bf16.mxu0 0
        %650 = vmatmul.mubr.bf16.gmra.mxu0 %v546
        %v651 = vpop.f32.mrf.mxu0
        %v652 = vadd.f32 %v567, %v651
        %v653 = vpop.f32.mrf.mxu0
        %v654 = vpop.f32.mrf.mxu0
        %v655 = vpop.f32.mrf.mxu0
        %656 = vdwg.mxu0
        %657 = vmax.xlane.f32.xlu0 %v652
        %v658 = vpop.xlane.xlu0 %657
        %v659 = vsub.f32 %v652, %v658
        %v660 = vmul.f32 %v659, 1.442695
        %v661 = vpow.pop %v660
        %662 = vadd.xlane.f32.xlu0 %v661
        %v663 = vpop.xlane.xlu0 %662
        %v664 = vrcp.pop %v663
        %v665 = vmul.f32 %v661, %v664
        %666 = vst [vmem:[%s313] sm:$0xff] %v665
        %s667 = sand.u32 %s183, 1
        %s668 = scalar_lea.sflag [#allocation4], %s667
        %s669 = sand.u32 %s183, 1
        %s670 = smul.addr %s669, 8
        %s671 = scalar_lea.vmem [#allocation8], %s670
        // Predicated region
        $region61: #{neural_net_forward.1} parent=47 // pred_check
          %p672 = pneg %p193
        $region62: #{neural_net_forward.1} parent=47 // pred_check_branch
          %674 = sbr.rel (%p672) target = $region64
        $region63: #{neural_net_forward.1} parent=47 // pred_region
          %s676 = ssub.s32 128, 128
          %677 = vsyncadd %s668, %s676
          %s678 = smul.addr %s23, 128
          %s679 = scalar_lea.hbm %s7, %s678
          %s681 = sshll.u32 %s671, 4
          %s682 = int_to_ptr.vmem [resolvable:$true] %s681
          %684 = dma.vmem_to_hbm [thread:$0]  %s682, 128, %s679, %s668
        $region64: #{neural_net_forward.1} parent=47 // pred_fallthru
          _
      $region48: #{neural_net_forward.1} parent=5 // pred_fallthru
        _
      %p685 = scmp.le.s32.totalorder 2, %s18
      // Predicated region
      $region65: #{neural_net_forward.1} parent=5 // pred_check
        %p686 = pneg %p685
      $region66: #{neural_net_forward.1} parent=5 // pred_check_branch
        %688 = sbr.rel (%p686) target = $region68
      $region67: #{neural_net_forward.1} parent=5 // pred_region
        %s689 = ssub.s32 %s18, 2
        // Predicated region
        $region69: #{neural_net_forward.1} parent=67 // pred_check
          %p690 = pneg %p199
        $region70: #{neural_net_forward.1} parent=67 // pred_check_branch
          %692 = sbr.rel (%p690) target = $region72
        $region71: #{neural_net_forward.1} parent=67 // pred_region
          %s693 = sand.u32 %s184, 1
          %s694 = scalar_lea.sflag [#allocation4], %s693
          %s695 = sand.u32 %s184, 1
          %s696 = smul.addr %s695, 8
          %s697 = scalar_lea.vmem [#allocation8], %s696
          %698 = dma.done %s694, 128
        $region72: #{neural_net_forward.1} parent=67 // pred_fallthru
          _
      $region68: #{neural_net_forward.1} parent=5 // pred_fallthru
        _
    $region6: #{neural_net_forward.1} parent=1 // loop_footer
      %s22 = sadd.s32 1, %s18
    $region7: #{neural_net_forward.1} parent=1 // loop_footer_branch
      %17 = sbr.rel target = $region3
    $region8: #{neural_net_forward.1} parent=1 // loop_exit
      _
    %699 = vsyncpa [#allocation3], 1
    %s700 = scalar_lea.sflag [#allocation3], 1
    %701 = vsyncpa %s700, 1
    %702 = vsyncpa [#allocation6], 1
    %703 = vsyncpa [#allocation4], 1
    %s704 = scalar_lea.sflag [#allocation4], 1
    %705 = vsyncpa %s704, 1

</llo_original>
